<compile_context>
chip_gen: v5e
topology: v5e:2x2
jax: 0.10.0
libtpu: 0.0.40
codegen_flags: <defaults>
</compile_context>

<pallas_src>
import functools

import jax
import jax.numpy as jnp
from jax.experimental import pallas as pl
from jax.experimental.pallas import tpu as pltpu


# ---------------------------------------------------------------------------
# Kernels
# ---------------------------------------------------------------------------

def _wlp_kernel_f32(w_ref, x_ref, o_ref):
    """f32 output: accumulate directly into the output block (resident over l)."""
    l = pl.program_id(1)
    contrib = w_ref[l] * x_ref[0].astype(jnp.float32)

    @pl.when(l == 0)
    def _():
        o_ref[...] = contrib           # init merged with first accumulation

    @pl.when(l > 0)
    def _():
        o_ref[...] += contrib


def _wlp_kernel_scratch(w_ref, x_ref, o_ref, acc_ref):
    """Non-f32 output: f32 VMEM scratch accumulator, cast once at the end."""
    l = pl.program_id(1)
    contrib = w_ref[l] * x_ref[0].astype(jnp.float32)

    @pl.when(l == 0)
    def _():
        acc_ref[...] = contrib

    @pl.when(l > 0)
    def _():
        acc_ref[...] += contrib

    @pl.when(l == pl.num_programs(1) - 1)
    def _():
        o_ref[...] = acc_ref[...].astype(o_ref.dtype)


# ---------------------------------------------------------------------------
# Layout helpers
# ---------------------------------------------------------------------------

def _choose_lane_width(n):
    """Largest lane-dense width (multiple of 128) that divides n, or None."""
    for c in (2048, 1024, 512, 256, 128):
        if n % c == 0:
            return c
    return None


def _choose_row_tiles(n_rows, n_cols, itemsize):
    """Pick (row_tile, num_row_tiles). Target ~4 MiB input blocks."""
    budget_bytes = 4 << 20
    max_rows = max(8, budget_bytes // max(1, n_cols * itemsize))
    max_rows -= max_rows % 8
    max_rows = max(8, max_rows)

    if n_rows <= max_rows:
        # Whole extent fits one block. Split into 2 "parallel" tiles (megacore
        # on v7x) when the block is big enough to be worth an extra grid step.
        if n_rows % 16 == 0 and n_rows * n_cols * itemsize > (1 << 20):
            return n_rows // 2, 2
        return n_rows, 1

    # Prefer a multiple-of-8 divisor of n_rows (no ragged boundary block).
    t = max_rows
    while t >= 8:
        if n_rows % t == 0:
            return t, n_rows // t
        t -= 8

    # No nice divisor: ragged tail via cdiv grid; the boundary block is masked
    # by the pipeline (elementwise op -> padding region is discarded).
    t = max_rows
    return t, -(-n_rows // t)


# ---------------------------------------------------------------------------
# Wrapper
# ---------------------------------------------------------------------------

@functools.partial(jax.jit, static_argnames=("layer_start",))
def weighted_layer_pooling(all_hidden_states, layer_weights, layer_start=4):
    """all_hidden_states: (num_layers+1, B, S, H); layer_weights: (L,)."""
    Lp1, B, S, H = all_hidden_states.shape
    L = Lp1 - layer_start
    assert layer_weights.shape == (L,)

    in_dtype = all_hidden_states.dtype
    out_dtype = jnp.promote_types(in_dtype, layer_weights.dtype)

    # Normalize once in XLA (L scalars, free); kernel is a pure weighted sum.
    w = (layer_weights / jnp.sum(layer_weights)).astype(jnp.float32)

    n = B * S * H
    C = _choose_lane_width(n)
    if C is not None:
        M = n // C                               # lane-dense factoring
    else:
        M, C = B * S, H                          # ragged-H fallback, full last dim

    # Free contiguous reshape of the FULL tensor; layer_start lives in index_map.
    x_view = all_hidden_states.reshape(Lp1, M, C)

    in_item = jnp.dtype(in_dtype).itemsize
    out_item = jnp.dtype(out_dtype).itemsize
    tM, n_row_tiles = _choose_row_tiles(M, C, in_item)

    use_scratch = jnp.dtype(out_dtype) != jnp.dtype(jnp.float32)
    kernel = _wlp_kernel_scratch if use_scratch else _wlp_kernel_f32
    scratch_shapes = [pltpu.VMEM((tM, C), jnp.float32)] if use_scratch else []

    # Resident VMEM: 2 input bufs + 2 output bufs (+ f32 scratch if needed).
    block_elems = tM * C
    resident = 2 * block_elems * in_item + 2 * block_elems * out_item
    if use_scratch:
        resident += block_elems * 4
    vmem_limit = int(min(64 << 20, max(32 << 20, resident * 3 // 2 + (4 << 20))))

    cost = pl.CostEstimate(
        flops=2 * L * n,
        transcendentals=0,
        bytes_accessed=L * n * in_item + n * out_item)

    out2 = pl.pallas_call(
        kernel,
        out_shape=jax.ShapeDtypeStruct((M, C), out_dtype),
        grid=(n_row_tiles, L),                              # L innermost (reduction)
        in_specs=[
            pl.BlockSpec(memory_space=pltpu.MemorySpace.SMEM),        # normalized w
            pl.BlockSpec((1, tM, C), lambda r, l: (l + layer_start, r, 0)),
        ],
        out_specs=pl.BlockSpec((tM, C), lambda r, l: (r, 0)),         # resident acc
        scratch_shapes=scratch_shapes,
        compiler_params=pltpu.CompilerParams(
            dimension_semantics=("parallel", "arbitrary"),
            vmem_limit_bytes=vmem_limit),
        cost_estimate=cost,
    )(w, x_view)

    return out2.reshape(B, S, H)


# ---------------------------------------------------------------------------
# Reference + demo
# ---------------------------------------------------------------------------

def _reference(all_hidden_states, layer_weights, layer_start=4):
    x = all_hidden_states[layer_start:].astype(jnp.float32)
    wf = layer_weights[:, None, None, None].astype(jnp.float32)
    return (wf * x).sum(axis=0) / jnp.sum(layer_weights)


if __name__ == "__main__":
    num_layers = 12
    layer_start = 4
    B, S, H = 2, 8, 32

    key = jax.random.PRNGKey(0)
    all_hidden_states = jax.random.normal(
        key, (num_layers + 1, B, S, H), dtype=jnp.float32)

    # Matches nn.Parameter(torch.tensor([1]*(num_layers+1-layer_start), float))
    layer_weights = jnp.ones((num_layers + 1 - layer_start,), dtype=jnp.float32)

    out = weighted_layer_pooling(all_hidden_states, layer_weights,
                                 layer_start=layer_start)
    out = jax.block_until_ready(out)

    ref = _reference(all_hidden_states, layer_weights, layer_start)
    assert out.shape == (B, S, H)
    err = float(jnp.max(jnp.abs(out - ref)))
    assert err < 1e-5, err

    print("KERNEL_OK")
</pallas_src>

<mosaic_0001>
module attributes {stable_mosaic.version = 11 : i64} {
  func.func @_wlp_kernel_f32(%arg0: i32, %arg1: i32, %arg2: memref<9xf32, #tpu.memory_space<smem>>, %arg3: memref<1x1x512xf32, #tpu.memory_space<vmem>>, %arg4: memref<1x512xf32, #tpu.memory_space<vmem>>) attributes {dimension_semantics = [#tpu.dimension_semantics<parallel>, #tpu.dimension_semantics<arbitrary>], iteration_bounds = array<i64: 1, 9>, scalar_prefetch = 0 : i64, scratch_operands = 0 : i64, tpu.core_type = #tpu.core_type<tc>, window_params = [{transform_indices = @transform_0, window_bounds = array<i64: 9>}, {transform_indices = @transform_1, window_bounds = array<i64: 1, 1, 512>}, {transform_indices = @transform_2, window_bounds = array<i64: 1, 512>}]} {
    %0 = arith.index_cast %arg1 : i32 to index
    %1 = memref.load %arg2[%0] : memref<9xf32, #tpu.memory_space<smem>>
    %c0 = arith.constant 0 : index
    %c0_0 = arith.constant 0 : index
    %c0_1 = arith.constant 0 : index
    %2 = vector.load %arg3[%c0, %c0_0, %c0_1] : memref<1x1x512xf32, #tpu.memory_space<vmem>>, vector<1x1x512xf32>
    %3 = vector.shape_cast %2 : vector<1x1x512xf32> to vector<1x512xf32>
    %4 = vector.broadcast %1 : f32 to vector<1x512xf32>
    %5 = arith.mulf %4, %3 : vector<1x512xf32>
    %c0_i32 = arith.constant 0 : i32
    %6 = arith.cmpi eq, %arg1, %c0_i32 : i32
    %7 = arith.extui %6 : i1 to i32
    %c0_i32_2 = arith.constant 0 : i32
    %8 = arith.cmpi ne, %7, %c0_i32_2 : i32
    scf.if %8 {
      %c0_5 = arith.constant 0 : index
      %c0_6 = arith.constant 0 : index
      %12 = vector.load %arg4[%c0_5, %c0_6] : memref<1x512xf32, #tpu.memory_space<vmem>>, vector<1x512xf32>
      tpu.vector_store %arg4[%c0_5, %c0_6], %5 {strides = array<i32>} : memref<1x512xf32, #tpu.memory_space<vmem>>, vector<1x512xf32>,
    } else {
    }
    %c0_i32_3 = arith.constant 0 : i32
    %9 = arith.cmpi sgt, %arg1, %c0_i32_3 : i32
    %10 = arith.extui %9 : i1 to i32
    %c0_i32_4 = arith.constant 0 : i32
    %11 = arith.cmpi ne, %10, %c0_i32_4 : i32
    scf.if %11 {
      %c0_5 = arith.constant 0 : index
      %c0_6 = arith.constant 0 : index
      %12 = vector.load %arg4[%c0_5, %c0_6] : memref<1x512xf32, #tpu.memory_space<vmem>>, vector<1x512xf32>
      %13 = arith.addf %12, %5 : vector<1x512xf32>
      %c0_7 = arith.constant 0 : index
      %c0_8 = arith.constant 0 : index
      %14 = vector.load %arg4[%c0_7, %c0_8] : memref<1x512xf32, #tpu.memory_space<vmem>>, vector<1x512xf32>
      tpu.vector_store %arg4[%c0_7, %c0_8], %13 {strides = array<i32>} : memref<1x512xf32, #tpu.memory_space<vmem>>, vector<1x512xf32>,
    } else {
    }
    return
  }
  func.func @transform_0(%arg0: i32, %arg1: i32) -> i32 {
    %c0_i32 = arith.constant 0 : i32
    %c0_i32_0 = arith.constant 0 : i32
    return %c0_i32 : i32
  }
  func.func @transform_1(%arg0: i32, %arg1: i32) -> (i32, i32, i32) {
    %c4_i32 = arith.constant 4 : i32
    %0 = arith.addi %arg1, %c4_i32 : i32
    %c0_i32 = arith.constant 0 : i32
    %c0_i32_0 = arith.constant 0 : i32
    return %0, %arg0, %c0_i32 : i32, i32, i32
  }
  func.func @transform_2(%arg0: i32, %arg1: i32) -> (i32, i32) {
    %c0_i32 = arith.constant 0 : i32
    %c0_i32_0 = arith.constant 0 : i32
    return %arg0, %c0_i32 : i32, i32
  }
}

</mosaic_0001>

<llo_original>
// kernel: weighted_layer_pooling.1
$region0: #{weighted_layer_pooling.1}
  #allocation0 [shape = 'u32[]', space=smem, size = 0x4, offset = 0x4, fixed_abs, tag = 'smem constant byte address 0x4 - core index']
  #allocation1 [shape = 'u32[72,128]{1,0:T(1,128)}', space=vmem, size = 0x9000, scoped, tag = 'internal scratch']
  %s0 = inlined_call_operand.vmem [shape: f32[9], index: 0, kind: input, shape index: {}]
  %s1 = inlined_call_operand.vmem [shape: f32[13,1,512], index: 1, kind: input, shape index: {}]
  %s2 = inlined_call_operand.vmem [shape: f32[1,512], index: 2, kind: output, shape index: {}]
  %s3 = sld [smem:[#allocation0]]
  $region53: #{weighted_layer_pooling.1} parent=0
    _
  %s5 = ssub.s32 1, %s3
  %s6 = scalar_select 0, %s5, %s3
  $region1: #{weighted_layer_pooling.1} parent=0
    #allocation2 [shape = 'u8[512]{0}', space=smem, size = 0x200, scoped, tag = 'input window, operand 0, single buffered']
    #allocation3 [shape = 's32[2]{0}', space=sflag, size = 0x8, scoped, tag = 'scoped memory for weighted_layer_pooling.1']
    %7 = vsyncpa [#allocation3], 0
    loop: start=0, step=1, limit=11
    $region2: #{weighted_layer_pooling.1} parent=1 // loop_pre_header
      _
    $region3: #{weighted_layer_pooling.1} parent=1 // loop_header
      %s9 = sphi 0, %s13
      %p10 = scmp.ge.s32.totalorder %s9, 11
      %s16 = sphi 0, %s28
      %s17 = sphi 0, %s24
      %s18 = sphi 0, %s16
      %s19 = sphi 0, %s17
      %s20 = sphi 0, %s18
      %s21 = sphi 0, %s19
      %s29 = sphi 0, %s29
      %s31 = sphi 0, %s29
      %s32 = sphi 0, %s31
      %s46 = sphi 0, %s32
      %s56 = sphi 0, %s58
      %s59 = sphi 0, %s56
      %s60 = sphi 0, %s59
      %s76 = sphi 0, %s60
      %s82 = sphi 0, %s84
      %s85 = sphi 0, %s82
      %s86 = sphi 0, %s85
      %s102 = sphi 0, %s86
    $region4: #{weighted_layer_pooling.1} parent=1 // loop_header_branch
      %12 = sbr.rel (%p10) target = $region8
    $region5: #{weighted_layer_pooling.1} parent=1 // loop_body
      %s14 = ssub.s32 %s9, 1
      %s15 = ssub.s32 %s9, 2
      %s22 = sadd.s32 1, %s17
      %p23 = scmp.ge.s32.totalorder %s22, 9
      %s24 = scalar_select %p23, 0, %s22
      %s25 = sadd.s32 1, %s16
      %s26 = scalar_select %p23, %s25, %s16
      %p27 = scmp.ge.s32.totalorder %s26, 1
      %s28 = scalar_select %p27, 0, %s26
      %s30 = sadd.s32 %s29, 1
      %p33 = scmp.eq.s32.totalorder %s9, 8
      %p34 = scmp.ne.s32.totalorder %s29, %s31
      %p35 = scmp.eq.s32.totalorder %s9, 0
      %p36 = por %p34, %p35
      %p37 = scmp.ne.s32.totalorder %s29, %s31
      %p38 = scmp.eq.s32.totalorder %s14, 8
      %p39 = por %p37, %p38
      %p40 = scmp.ne.s32.totalorder %s31, %s32
      %p41 = scmp.eq.s32.totalorder %s14, 0
      %p42 = por %p40, %p41
      %p43 = scmp.ne.s32.totalorder %s31, %s32
      %p44 = scmp.eq.s32.totalorder %s15, 8
      %p45 = por %p43, %p44
      %p47 = scmp.ne.s32.totalorder %s32, %s46
      %p48 = scmp.eq.s32.totalorder %s15, 0
      %p49 = por %p47, %p48
      %s50 = sadd.s32 %s17, 4
      %s51 = sadd.s32 %s24, 4
      %s52 = ssub.s32 %s50, %s51
      %s53 = ssub.s32 %s16, %s28
      %s54 = sor.u32 %s52, %s53
      %p55 = scmp.eq.s32.totalorder %s54, 0
      %s57 = sadd.s32 %s56, 1
      %s58 = scalar_select %p55, %s56, %s57
      %p61 = pneg %p55
      %p62 = scmp.eq.s32.totalorder %s9, 8
      %p63 = por %p61, %p62
      %p64 = scmp.ne.s32.totalorder %s56, %s59
      %p65 = scmp.eq.s32.totalorder %s9, 0
      %p66 = por %p64, %p65
      %p67 = scmp.ne.s32.totalorder %s56, %s59
      %p68 = scmp.eq.s32.totalorder %s14, 8
      %p69 = por %p67, %p68
      %p70 = scmp.ne.s32.totalorder %s59, %s60
      %p71 = scmp.eq.s32.totalorder %s14, 0
      %p72 = por %p70, %p71
      %p73 = scmp.ne.s32.totalorder %s59, %s60
      %p74 = scmp.eq.s32.totalorder %s15, 8
      %p75 = por %p73, %p74
      %p77 = scmp.ne.s32.totalorder %s60, %s76
      %p78 = scmp.eq.s32.totalorder %s15, 0
      %p79 = por %p77, %p78
      %s80 = ssub.s32 %s16, %s28
      %p81 = scmp.eq.s32.totalorder %s80, 0
      %s83 = sadd.s32 %s82, 1
      %s84 = scalar_select %p81, %s82, %s83
      %p87 = pneg %p81
      %p88 = scmp.eq.s32.totalorder %s9, 8
      %p89 = por %p87, %p88
      %p90 = scmp.ne.s32.totalorder %s82, %s85
      %p91 = scmp.eq.s32.totalorder %s9, 0
      %p92 = por %p90, %p91
      %p93 = scmp.ne.s32.totalorder %s82, %s85
      %p94 = scmp.eq.s32.totalorder %s14, 8
      %p95 = por %p93, %p94
      %p96 = scmp.ne.s32.totalorder %s85, %s86
      %p97 = scmp.eq.s32.totalorder %s14, 0
      %p98 = por %p96, %p97
      %p99 = scmp.ne.s32.totalorder %s85, %s86
      %p100 = scmp.eq.s32.totalorder %s15, 8
      %p101 = por %p99, %p100
      %p103 = scmp.ne.s32.totalorder %s86, %s102
      %p104 = scmp.eq.s32.totalorder %s15, 0
      %p105 = por %p103, %p104
      %p106 = scmp.le.s32.totalorder 1, %s9
      %p107 = scmp.lt.s32.totalorder %s9, 10
      %p108 = pnand %p106, %p107
      %p109 = pneg %p108
      // Predicated region
      $region9: #{weighted_layer_pooling.1} parent=5 // pred_check
        _
      $region10: #{weighted_layer_pooling.1} parent=5 // pred_check_branch
        %111 = sbr.rel (%p108) target = $region12
      $region11: #{weighted_layer_pooling.1} parent=5 // pred_region
        %s112 = ssub.s32 %s9, 1
        // Predicated region
        $region13: #{weighted_layer_pooling.1} parent=11 // pred_check
          %p113 = pneg %p42
        $region14: #{weighted_layer_pooling.1} parent=11 // pred_check_branch
          %115 = sbr.rel (%p113) target = $region16
        $region15: #{weighted_layer_pooling.1} parent=11 // pred_region
          %117 = vsyncadd [#allocation3], 0
          %s119 = sshll.u32 %s0, 4
          %s120 = int_to_ptr.vmem [resolvable:$true] %s119
          %122 = dma.vmem_to_smem %s120, 16, [#allocation2], [#allocation3]
        $region16: #{weighted_layer_pooling.1} parent=11 // pred_fallthru
          _
      $region12: #{weighted_layer_pooling.1} parent=5 // pred_fallthru
        _
      %p123 = scmp.lt.s32.totalorder %s9, 9
      // Predicated region
      $region17: #{weighted_layer_pooling.1} parent=5 // pred_check
        %p124 = pneg %p123
      $region18: #{weighted_layer_pooling.1} parent=5 // pred_check_branch
        %126 = sbr.rel (%p124) target = $region20
      $region19: #{weighted_layer_pooling.1} parent=5 // pred_region
        // Predicated region
        $region21: #{weighted_layer_pooling.1} parent=19 // pred_check
          %p127 = pneg %p66
        $region22: #{weighted_layer_pooling.1} parent=19 // pred_check_branch
          %129 = sbr.rel (%p127) target = $region24
        $region23: #{weighted_layer_pooling.1} parent=19 // pred_region
          %s130 = sadd.s32 %s17, 4
          %p131 = scmp.lt.s32.totalorder %s130, 12
          %s132 = scalar_select %p131, %s130, 12
          %p133 = scmp.lt.s32.totalorder %s16, 0
          %s134 = scalar_select %p133, %s16, 0
          %s135 = smul.addr %s134, 4
          %s136 = smul.addr %s132, 4
          %s137 = sadd.s32 %s135, %s136
          %s138 = scalar_lea.vmem %s1, %s137
          %s139 = sadd.s32 %s17, 4
        $region24: #{weighted_layer_pooling.1} parent=19 // pred_fallthru
          _
      $region20: #{weighted_layer_pooling.1} parent=5 // pred_fallthru
        _
      %p140 = scmp.le.s32.totalorder 1, %s9
      %p141 = scmp.lt.s32.totalorder %s9, 10
      %p142 = pnand %p140, %p141
      %p143 = pneg %p142
      // Predicated region
      $region25: #{weighted_layer_pooling.1} parent=5 // pred_check
        _
      $region26: #{weighted_layer_pooling.1} parent=5 // pred_check_branch
        %145 = sbr.rel (%p142) target = $region28
      $region27: #{weighted_layer_pooling.1} parent=5 // pred_region
        %s146 = ssub.s32 %s9, 1
        // Predicated region
        $region29: #{weighted_layer_pooling.1} parent=27 // pred_check
          %p147 = pneg %p42
        $region30: #{weighted_layer_pooling.1} parent=27 // pred_check_branch
          %149 = sbr.rel (%p147) target = $region32
        $region31: #{weighted_layer_pooling.1} parent=27 // pred_region
          %151 = dma.done [#allocation3], 16
        $region32: #{weighted_layer_pooling.1} parent=27 // pred_fallthru
          _
        %152 = sfence
        %p153 = pneg %p42
        %p154 = pneg %p39
        %s155 = sadd.s32 %s19, 4
        %p156 = scmp.lt.s32.totalorder %s155, 12
        %s157 = scalar_select %p156, %s155, 12
        %p158 = scmp.lt.s32.totalorder %s18, 0
        %s159 = scalar_select %p158, %s18, 0
        %s160 = smul.addr %s159, 4
        %s161 = smul.addr %s157, 4
        %s162 = sadd.s32 %s160, %s161
        %s163 = scalar_lea.vmem %s1, %s162
        %p164 = pneg %p72
        %p165 = pneg %p69
        %p166 = pneg %p98
        %p167 = pneg %p95
        %p168 = scmp.lt.s32.totalorder %s18, 0
        %s169 = scalar_select %p168, %s18, 0
        %s170 = smul.addr %s169, 4
        %s171 = scalar_lea.vmem %s2, %s170
        %s172 = sadd.s32 %s19, 4
        %p173 = scmp.lt.s32.totalorder %s172, 12
        %s174 = scalar_select %p173, %s172, 12
        %p175 = scmp.lt.s32.totalorder %s18, 0
        %s176 = scalar_select %p175, %s18, 0
        %s177 = smul.addr %s176, 4
        %s178 = smul.addr %s174, 4
        %s179 = sadd.s32 %s177, %s178
        %s180 = scalar_lea.vmem %s1, %s179
        %s181 = sadd.s32 %s19, 4
        %p182 = scmp.lt.s32.totalorder %s18, 0
        %s183 = scalar_select %p182, %s18, 0
        %s184 = smul.addr %s183, 4
        %s185 = scalar_lea.vmem %s2, %s184
        %s186 = sld [smem:[#allocation2 + %s19]]
        %v187 = vld [vmem:[%s180] sm:$0xf]
        %v188 = vstv %s186
        %v189 = vmul.f32 %v188, %v187
        %p190 = scmp.eq.s32.totalorder %s19, 0
        // Predicated region
        $region33: #{weighted_layer_pooling.1} parent=27 // pred_check
          %p191 = pneg %p190
        $region34: #{weighted_layer_pooling.1} parent=27 // pred_check_branch
          %193 = sbr.rel (%p191) target = $region36
        $region35: #{weighted_layer_pooling.1} parent=27 // pred_region
          %v194 = vlaneseq
          %vm195 = vcmp.ge.s32.totalorder %v194, 0
          %vm196 = vcmp.lt.s32.totalorder %v194, 512
          %vm197 = vmand %vm195, %vm196
          %198 = vst.msk [vmem:[%s185] sm:$0xf] %vm197, %v189
        $region36: #{weighted_layer_pooling.1} parent=27 // pred_fallthru
          _
        %p199 = scmp.gt.s32.totalorder %s19, 0
        // Predicated region
        $region37: #{weighted_layer_pooling.1} parent=27 // pred_check
          %p200 = pneg %p199
        $region38: #{weighted_layer_pooling.1} parent=27 // pred_check_branch
          %202 = sbr.rel (%p200) target = $region40
        $region39: #{weighted_layer_pooling.1} parent=27 // pred_region
          %v203 = vld [vmem:[%s185] sm:$0xf]
          %v204 = vadd.f32 %v203, %v189
          %v205 = vlaneseq
          %vm206 = vcmp.ge.s32.totalorder %v205, 0
          %vm207 = vcmp.lt.s32.totalorder %v205, 512
          %vm208 = vmand %vm206, %vm207
          %209 = vst.msk [vmem:[%s185] sm:$0xf] %vm208, %v204
        $region40: #{weighted_layer_pooling.1} parent=27 // pred_fallthru
          _
        %p210 = scmp.lt.s32.totalorder %s18, 0
        %s211 = scalar_select %p210, %s18, 0
        %s212 = smul.addr %s211, 4
        %s213 = scalar_lea.vmem %s2, %s212
        // Predicated region
        $region41: #{weighted_layer_pooling.1} parent=27 // pred_check
          %p214 = pneg %p95
        $region42: #{weighted_layer_pooling.1} parent=27 // pred_check_branch
          %216 = sbr.rel (%p214) target = $region44
        $region43: #{weighted_layer_pooling.1} parent=27 // pred_region
          _
        $region44: #{weighted_layer_pooling.1} parent=27 // pred_fallthru
          _
        // Predicated region
        $region45: #{weighted_layer_pooling.1} parent=27 // pred_check
          %p217 = pneg %p95
        $region46: #{weighted_layer_pooling.1} parent=27 // pred_check_branch
          %219 = sbr.rel (%p217) target = $region48
        $region47: #{weighted_layer_pooling.1} parent=27 // pred_region
          %p220 = scmp.lt.s32.totalorder %s18, 0
          %s221 = scalar_select %p220, %s18, 0
          %s222 = smul.addr %s221, 4
          %s223 = scalar_lea.vmem %s2, %s222
        $region48: #{weighted_layer_pooling.1} parent=27 // pred_fallthru
          _
      $region28: #{weighted_layer_pooling.1} parent=5 // pred_fallthru
        _
      %p224 = scmp.le.s32.totalorder 2, %s9
      // Predicated region
      $region49: #{weighted_layer_pooling.1} parent=5 // pred_check
        %p225 = pneg %p224
      $region50: #{weighted_layer_pooling.1} parent=5 // pred_check_branch
        %227 = sbr.rel (%p225) target = $region52
      $region51: #{weighted_layer_pooling.1} parent=5 // pred_region
        %s228 = ssub.s32 %s9, 2
      $region52: #{weighted_layer_pooling.1} parent=5 // pred_fallthru
        _
    $region6: #{weighted_layer_pooling.1} parent=1 // loop_footer
      %s13 = sadd.s32 1, %s9
    $region7: #{weighted_layer_pooling.1} parent=1 // loop_footer_branch
      %8 = sbr.rel target = $region3
    $region8: #{weighted_layer_pooling.1} parent=1 // loop_exit
      _
    %229 = vsyncpa [#allocation3], 1
    %s230 = scalar_lea.sflag [#allocation3], 1
    %231 = vsyncpa %s230, 1

</llo_original>
